<compile_context>
chip_gen: v6e
topology: v6e:2x2x1
jax: 0.10.0
libtpu: 0.0.40
codegen_flags: <defaults>
</compile_context>

<pallas_src>
import math
import functools

import jax
import jax.numpy as jnp
from jax.experimental import pallas as pl
from jax.experimental.pallas import tpu as pltpu


def _round_up(x, m):
    return ((x + m - 1) // m) * m


def _cdiv(a, b):
    return -(-a // b)


def _pick_tile(total, target, align):
    """Largest multiple of `align` that divides `total` and is <= max(target, align)."""
    t = min(_round_up(max(target, align), align), total)
    while total % t != 0:
        t -= align
    return t


def _mlp_kernel(x_ref, w1_ref, b1_ref, w2_ref, b2_ref, o_ref, acc_ref, *,
                approximate_gelu):
    """One (token-tile, hidden-tile) step of the fused MLP.

    grid = (num_token_tiles, num_hidden_tiles); the hidden axis is a reduction:
        acc += gelu(x @ W1[:, h_chunk] + b1[h_chunk]) @ W2[h_chunk, :]
    with the second bias added and the tile written back on the last hidden step.
    """
    h_idx = pl.program_id(1)

    @pl.when(h_idx == 0)
    def _():
        acc_ref[...] = jnp.zeros_like(acc_ref)

    cdt = w1_ref.dtype                                  # MXU operand dtype

    # First linear chunk (MXU), f32 accumulation, bias in f32.
    h = jnp.dot(x_ref[...], w1_ref[...], preferred_element_type=jnp.float32)
    h = h + b1_ref[...]                                 # (tn, th) + (1, th)

    if approximate_gelu:
        # tanh-approx GELU -> EUP slot (keeps the VALU free after fast MXUs).
        h = jax.nn.gelu(h, approximate=True)
    else:
        # Exact GELU (torch.nn.GELU default): 0.5 * x * (1 + erf(x / sqrt(2))).
        h = 0.5 * h * (1.0 + jax.lax.erf(h * jnp.float32(1.0 / math.sqrt(2.0))))

    # Second linear chunk (MXU), accumulated across hidden tiles in f32 VMEM.
    acc_ref[...] += jnp.dot(h.astype(cdt), w2_ref[...],
                            preferred_element_type=jnp.float32)

    @pl.when(h_idx == pl.num_programs(1) - 1)
    def _():
        o_ref[...] = (acc_ref[...] + b2_ref[...]).astype(o_ref.dtype)


def prepare_mlp_params(w1, b1, w2, b2, *, use_bf16_matmul=True):
    """One-time parameter prep: pad to lane-dense (multiple-of-128) shapes and
    cast weights to the MXU operand dtype.  Doing this at init keeps all weight
    pad/convert HBM traffic out of the per-call forward path.

    Note: use_bf16_matmul=True changes the hidden-activation precision as well
    as weight precision (both matmul operands are bf16, accumulation stays f32).
    """
    D, H = w1.shape
    assert w2.shape == (H, D) and b1.shape == (H,) and b2.shape == (D,)
    Dp, Hp = _round_up(D, 128), _round_up(H, 128)
    wdt = jnp.bfloat16 if use_bf16_matmul else w1.dtype
    return {
        "w1": jnp.pad(w1, ((0, Dp - D), (0, Hp - H))).astype(wdt),
        "b1": jnp.pad(b1, (0, Hp - H)).reshape(1, Hp).astype(jnp.float32),
        "w2": jnp.pad(w2, ((0, Hp - H), (0, Dp - D))).astype(wdt),
        "b2": jnp.pad(b2, (0, Dp - D)).reshape(1, Dp).astype(jnp.float32),
        "D": D, "H": H, "Dp": Dp, "Hp": Hp,
        "compute_dtype": wdt,
    }


def mlp_forward(x, params, *, tile_n=256, tile_h=512, approximate_gelu=True,
                dropout_level=0.0, training=False, out_dtype=None):
    """x: (batch, seq, embed_dim) -> (batch, seq, embed_dim)."""
    if training and dropout_level > 0.0:
        # TODO(synk): training-mode dropout needs pltpu.prng_seed / prng_random_bits.
        raise NotImplementedError("training-mode dropout not implemented (eval only)")

    B, S, D = x.shape
    assert D == params["D"], "x embed_dim does not match prepared params"
    Dp, Hp = params["Dp"], params["Hp"]
    cdt = params["compute_dtype"]
    out_dtype = x.dtype if out_dtype is None else out_dtype
    N = B * S

    # ---- Token tiling: keep padding waste small and guarantee >= 2 tiles when
    # there is enough work, so the "parallel" axis can shard across v7x's 2 TCs.
    n_tok = _cdiv(N, tile_n)
    if n_tok < 2 and N > 8:
        n_tok = 2
    tn = _round_up(_cdiv(N, n_tok), 8)
    Np = tn * n_tok

    # ---- Hidden tiling (reduction axis): bounds weight VMEM to O(Dp * th).
    th = _pick_tile(Hp, tile_h, 128)

    # ---- VMEM sizing: shrink tiles until the pipeline fits the chip budget;
    # never clamp the limit below the true requirement.
    def vmem_need(tn_, th_):
        isz_c = jnp.dtype(cdt).itemsize
        isz_o = jnp.dtype(out_dtype).itemsize
        return (2 * tn_ * Dp * isz_c          # x tiles (double-buffered)
                + 2 * Dp * th_ * isz_c        # W1 tiles
                + 2 * th_ * Dp * isz_c        # W2 tiles
                + 2 * th_ * 4 + 2 * Dp * 4    # biases
                + 2 * tn_ * Dp * isz_o        # out tiles
                + tn_ * Dp * 4                # f32 accumulator scratch
                + tn_ * th_ * 4               # f32 hidden intermediate
                + (4 << 20))                  # headroom

    try:
        vmem_cap = pltpu.get_tpu_info().vmem_capacity_bytes
    except Exception:
        vmem_cap = 64 << 20                   # conservative (v7x per-TC size)
    budget = int(vmem_cap * 0.9)
    while vmem_need(tn, th) > budget and th > 128:
        th = _pick_tile(Hp, th // 2, 128)
    while vmem_need(tn, th) > budget and tn > 8:
        tn = _round_up(max(tn // 2, 8), 8)
        n_tok = _cdiv(N, tn)
        Np = tn * n_tok
    vmem_limit = int(max(vmem_need(tn, th), 32 << 20))

    grid = (n_tok, Hp // th)

    # ---- Activations: pad + cast once in the wrapper; the kernel then DMAs
    # compute-dtype (bf16) tiles directly (half the x HBM->VMEM bytes).
    x2 = jnp.pad(x.reshape(N, D), ((0, Np - N), (0, Dp - D))).astype(cdt)

    kernel = functools.partial(_mlp_kernel, approximate_gelu=approximate_gelu)

    cost = pl.CostEstimate(
        flops=4 * Np * Dp * Hp,               # two matmuls
        transcendentals=Np * Hp,              # GELU
        bytes_accessed=(x2.size * x2.dtype.itemsize
                        + params["w1"].size * params["w1"].dtype.itemsize
                        + params["w2"].size * params["w2"].dtype.itemsize
                        + (Hp + Dp) * 4
                        + Np * Dp * jnp.dtype(out_dtype).itemsize),
    )

    out2 = pl.pallas_call(
        kernel,
        out_shape=jax.ShapeDtypeStruct((Np, Dp), out_dtype),
        grid_spec=pltpu.PrefetchScalarGridSpec(
            num_scalar_prefetch=0,
            grid=grid,
            in_specs=[
                pl.BlockSpec((tn, Dp), lambda i, h: (i, 0)),   # x tile (revisited over h)
                pl.BlockSpec((Dp, th), lambda i, h: (0, h)),   # W1 hidden-chunk
                pl.BlockSpec((1, th), lambda i, h: (0, h)),    # b1 hidden-chunk
                pl.BlockSpec((th, Dp), lambda i, h: (h, 0)),   # W2 hidden-chunk
                pl.BlockSpec((1, Dp), lambda i, h: (0, 0)),    # b2
            ],
            out_specs=pl.BlockSpec((tn, Dp), lambda i, h: (i, 0)),
            scratch_shapes=[pltpu.VMEM((tn, Dp), jnp.float32)],
        ),
        compiler_params=pltpu.CompilerParams(
            dimension_semantics=("parallel", "arbitrary"),
            vmem_limit_bytes=vmem_limit,
        ),
        cost_estimate=cost,
    )(x2, params["w1"], params["b1"], params["w2"], params["b2"])

    return out2[:N, :D].reshape(B, S, D)


def _init_params(key, embed_dim, mlp_multiplier, dtype=jnp.float32):
    """Deterministic init mimicking nn.Linear defaults (uniform +/- 1/sqrt(fan_in))."""
    hidden = mlp_multiplier * embed_dim
    k1, k2, k3, k4 = jax.random.split(key, 4)
    bound1 = 1.0 / math.sqrt(embed_dim)
    bound2 = 1.0 / math.sqrt(hidden)
    # stored as (in_features, out_features)
    w1 = jax.random.uniform(k1, (embed_dim, hidden), dtype, -bound1, bound1)
    b1 = jax.random.uniform(k2, (hidden,), dtype, -bound1, bound1)
    w2 = jax.random.uniform(k3, (hidden, embed_dim), dtype, -bound2, bound2)
    b2 = jax.random.uniform(k4, (embed_dim,), dtype, -bound2, bound2)
    return w1, b1, w2, b2


def _reference(x, w1, b1, w2, b2):
    h = x @ w1 + b1
    h = 0.5 * h * (1.0 + jax.lax.erf(h / jnp.sqrt(2.0)))
    return h @ w2 + b2


if __name__ == "__main__":
    # MLP(embed_dim=32, mlp_multiplier=4, dropout_level=0.1), eval mode.
    batch, seq, embed_dim, mlp_multiplier = 2, 8, 32, 4

    key = jax.random.PRNGKey(0)
    kx, kp = jax.random.split(key)
    x = jax.random.normal(kx, (batch, seq, embed_dim), jnp.float32)
    w1, b1, w2, b2 = _init_params(kp, embed_dim, mlp_multiplier)
    ref = _reference(x, w1, b1, w2, b2)

    # Fast path (default): bf16 MXU operands/activations + tanh-approx GELU.
    params_fast = prepare_mlp_params(w1, b1, w2, b2, use_bf16_matmul=True)
    out_fast = jax.block_until_ready(
        mlp_forward(x, params_fast, approximate_gelu=True))
    assert out_fast.shape == x.shape
    assert jnp.allclose(out_fast, ref, atol=3e-2, rtol=3e-2), \
        "fast (bf16 + tanh-GELU) path mismatch vs reference"

    # Strict path: f32 operands + exact erf GELU (torch.nn.GELU default numerics).
    params_exact = prepare_mlp_params(w1, b1, w2, b2, use_bf16_matmul=False)
    out_exact = jax.block_until_ready(
        mlp_forward(x, params_exact, approximate_gelu=False))
    assert jnp.allclose(out_exact, ref, atol=1e-5, rtol=1e-5), \
        "exact (f32 + erf-GELU) path mismatch vs reference"

    print("KERNEL_OK")
</pallas_src>

<mosaic_0001>
module attributes {stable_mosaic.version = 11 : i64} {
  func.func @_mlp_kernel(%arg0: i32, %arg1: i32, %arg2: memref<8x128xbf16, #tpu.memory_space<vmem>>, %arg3: memref<128x128xbf16, #tpu.memory_space<vmem>>, %arg4: memref<1x128xf32, #tpu.memory_space<vmem>>, %arg5: memref<128x128xbf16, #tpu.memory_space<vmem>>, %arg6: memref<1x128xf32, #tpu.memory_space<vmem>>, %arg7: memref<8x128xf32, #tpu.memory_space<vmem>>, %arg8: memref<8x128xf32, #tpu.memory_space<vmem>>) attributes {dimension_semantics = [#tpu.dimension_semantics<parallel>, #tpu.dimension_semantics<arbitrary>], iteration_bounds = array<i64: 2, 1>, scalar_prefetch = 0 : i64, scratch_operands = 1 : i64, tpu.core_type = #tpu.core_type<tc>, window_params = [{transform_indices = @transform_0, window_bounds = array<i64: 8, 128>}, {transform_indices = @transform_1, window_bounds = array<i64: 128, 128>}, {transform_indices = @transform_2, window_bounds = array<i64: 1, 128>}, {transform_indices = @transform_3, window_bounds = array<i64: 128, 128>}, {pipeline_mode = #tpu.pipeline_mode<synchronous>, transform_indices = @transform_4, window_bounds = array<i64: 1, 128>}, {transform_indices = @transform_5, window_bounds = array<i64: 8, 128>}]} {
    %c0_i32 = arith.constant 0 : i32
    %0 = arith.cmpi eq, %arg1, %c0_i32 : i32
    %1 = arith.extui %0 : i1 to i32
    %c0_i32_0 = arith.constant 0 : i32
    %2 = arith.cmpi ne, %1, %c0_i32_0 : i32
    scf.if %2 {
      %cst_19 = arith.constant 0.000000e+00 : f32
      %31 = vector.broadcast %cst_19 : f32 to vector<8x128xf32>
      %c0_20 = arith.constant 0 : index
      %c0_21 = arith.constant 0 : index
      %32 = vector.load %arg8[%c0_20, %c0_21] : memref<8x128xf32, #tpu.memory_space<vmem>>, vector<8x128xf32>
      tpu.vector_store %arg8[%c0_20, %c0_21], %31 {strides = array<i32>} : memref<8x128xf32, #tpu.memory_space<vmem>>, vector<8x128xf32>,
    } else {
    }
    %c0 = arith.constant 0 : index
    %c0_1 = arith.constant 0 : index
    %3 = vector.load %arg2[%c0, %c0_1] : memref<8x128xbf16, #tpu.memory_space<vmem>>, vector<8x128xbf16>
    %c0_2 = arith.constant 0 : index
    %c0_3 = arith.constant 0 : index
    %4 = vector.load %arg3[%c0_2, %c0_3] : memref<128x128xbf16, #tpu.memory_space<vmem>>, vector<128x128xbf16>
    %cst = arith.constant dense<0.000000e+00> : vector<8x128xf32>
    %5 = tpu.matmul %3, %4, %cst {dimension_numbers = #tpu.dot_dimension_numbers<[1], [0], [0], [1], [0, 0, 1, 1], [], []>} : vector<8x128xbf16>, vector<128x128xbf16>, vector<8x128xf32> -> vector<8x128xf32>
    %c0_4 = arith.constant 0 : index
    %c0_5 = arith.constant 0 : index
    %6 = vector.load %arg4[%c0_4, %c0_5] : memref<1x128xf32, #tpu.memory_space<vmem>>, vector<1x128xf32>
    %7 = vector.broadcast %6 : vector<1x128xf32> to vector<8x128xf32>
    %8 = arith.addf %5, %7 : vector<8x128xf32>
    %9 = arith.mulf %8, %8 : vector<8x128xf32>
    %10 = arith.mulf %8, %9 : vector<8x128xf32>
    %cst_6 = arith.constant 4.471500e-02 : f32
    %11 = vector.broadcast %cst_6 : f32 to vector<8x128xf32>
    %12 = arith.mulf %11, %10 : vector<8x128xf32>
    %13 = arith.addf %8, %12 : vector<8x128xf32>
    %cst_7 = arith.constant 0.797884583 : f32
    %14 = vector.broadcast %cst_7 : f32 to vector<8x128xf32>
    %15 = arith.mulf %14, %13 : vector<8x128xf32>
    %16 = math.tanh %15 : vector<8x128xf32>
    %cst_8 = arith.constant 1.000000e+00 : f32
    %17 = vector.broadcast %cst_8 : f32 to vector<8x128xf32>
    %18 = arith.addf %17, %16 : vector<8x128xf32>
    %cst_9 = arith.constant 5.000000e-01 : f32
    %19 = vector.broadcast %cst_9 : f32 to vector<8x128xf32>
    %20 = arith.mulf %19, %18 : vector<8x128xf32>
    %21 = arith.mulf %8, %20 : vector<8x128xf32>
    %c0_10 = arith.constant 0 : index
    %c0_11 = arith.constant 0 : index
    %22 = vector.load %arg8[%c0_10, %c0_11] : memref<8x128xf32, #tpu.memory_space<vmem>>, vector<8x128xf32>
    %23 = arith.truncf %21 : vector<8x128xf32> to vector<8x128xbf16>
    %c0_12 = arith.constant 0 : index
    %c0_13 = arith.constant 0 : index
    %24 = vector.load %arg5[%c0_12, %c0_13] : memref<128x128xbf16, #tpu.memory_space<vmem>>, vector<128x128xbf16>
    %cst_14 = arith.constant dense<0.000000e+00> : vector<8x128xf32>
    %25 = tpu.matmul %23, %24, %cst_14 {dimension_numbers = #tpu.dot_dimension_numbers<[1], [0], [0], [1], [0, 0, 1, 1], [], []>} : vector<8x128xbf16>, vector<128x128xbf16>, vector<8x128xf32> -> vector<8x128xf32>
    %26 = arith.addf %22, %25 : vector<8x128xf32>
    %c0_15 = arith.constant 0 : index
    %c0_16 = arith.constant 0 : index
    %27 = vector.load %arg8[%c0_15, %c0_16] : memref<8x128xf32, #tpu.memory_space<vmem>>, vector<8x128xf32>
    tpu.vector_store %arg8[%c0_15, %c0_16], %26 {strides = array<i32>} : memref<8x128xf32, #tpu.memory_space<vmem>>, vector<8x128xf32>,
    %c0_i32_17 = arith.constant 0 : i32
    %28 = arith.cmpi eq, %arg1, %c0_i32_17 : i32
    %29 = arith.extui %28 : i1 to i32
    %c0_i32_18 = arith.constant 0 : i32
    %30 = arith.cmpi ne, %29, %c0_i32_18 : i32
    scf.if %30 {
      %c0_19 = arith.constant 0 : index
      %c0_20 = arith.constant 0 : index
      %31 = vector.load %arg8[%c0_19, %c0_20] : memref<8x128xf32, #tpu.memory_space<vmem>>, vector<8x128xf32>
      %c0_21 = arith.constant 0 : index
      %c0_22 = arith.constant 0 : index
      %32 = vector.load %arg6[%c0_21, %c0_22] : memref<1x128xf32, #tpu.memory_space<vmem>>, vector<1x128xf32>
      %33 = vector.broadcast %32 : vector<1x128xf32> to vector<8x128xf32>
      %34 = arith.addf %31, %33 : vector<8x128xf32>
      %c0_23 = arith.constant 0 : index
      %c0_24 = arith.constant 0 : index
      %35 = vector.load %arg7[%c0_23, %c0_24] : memref<8x128xf32, #tpu.memory_space<vmem>>, vector<8x128xf32>
      tpu.vector_store %arg7[%c0_23, %c0_24], %34 {strides = array<i32>} : memref<8x128xf32, #tpu.memory_space<vmem>>, vector<8x128xf32>,
    } else {
    }
    return
  }
  func.func @transform_0(%arg0: i32, %arg1: i32) -> (i32, i32) {
    %c0_i32 = arith.constant 0 : i32
    %c0_i32_0 = arith.constant 0 : i32
    return %arg0, %c0_i32 : i32, i32
  }
  func.func @transform_1(%arg0: i32, %arg1: i32) -> (i32, i32) {
    %c0_i32 = arith.constant 0 : i32
    %c0_i32_0 = arith.constant 0 : i32
    return %c0_i32, %arg1 : i32, i32
  }
  func.func @transform_2(%arg0: i32, %arg1: i32) -> (i32, i32) {
    %c0_i32 = arith.constant 0 : i32
    %c0_i32_0 = arith.constant 0 : i32
    return %c0_i32, %arg1 : i32, i32
  }
  func.func @transform_3(%arg0: i32, %arg1: i32) -> (i32, i32) {
    %c0_i32 = arith.constant 0 : i32
    %c0_i32_0 = arith.constant 0 : i32
    return %arg1, %c0_i32 : i32, i32
  }
  func.func @transform_4(%arg0: i32, %arg1: i32) -> (i32, i32) {
    %c0_i32 = arith.constant 0 : i32
    %c0_i32_0 = arith.constant 0 : i32
    %c0_i32_1 = arith.constant 0 : i32
    return %c0_i32, %c0_i32_0 : i32, i32
  }
  func.func @transform_5(%arg0: i32, %arg1: i32) -> (i32, i32) {
    %c0_i32 = arith.constant 0 : i32
    %c0_i32_0 = arith.constant 0 : i32
    return %arg0, %c0_i32 : i32, i32
  }
}

</mosaic_0001>

<llo_original>
// kernel: tpu_custom_call.1
$region0: #{tpu_custom_call.1}
  #allocation0 [shape = 'u32[]', space=smem, size = 0x4, offset = 0x4, fixed_abs, tag = 'smem constant byte address 0x4 - core index']
  #allocation1 [shape = 'u32[144,128]{1,0:T(1,128)}', space=vmem, size = 0x12000, scoped, tag = 'internal scratch']
  #allocation2 [shape = 'f32[8,128]{1,0:T(8,128)}', space=vmem, size = 0x1000, scoped, tag = 'scratch operand']
  %s0 = inlined_call_operand.hbm [shape: bf16[16,128], index: 0, kind: input, shape index: {}]
  %s1 = inlined_call_operand.hbm [shape: bf16[128,128], index: 1, kind: input, shape index: {}]
  %s2 = inlined_call_operand.vmem [shape: f32[1,128], index: 2, kind: input, shape index: {}]
  %s3 = inlined_call_operand.hbm [shape: bf16[128,128], index: 3, kind: input, shape index: {}]
  %s4 = inlined_call_operand.vmem [shape: f32[1,128], index: 4, kind: input, shape index: {}]
  %s5 = inlined_call_operand.hbm [shape: f32[16,128], index: 5, kind: output, shape index: {}]
  %s6 = sld [smem:[#allocation0]]
  $region73: #{tpu_custom_call.1} parent=0
    _
  %s8 = ssub.s32 1, %s6
  %s9 = scalar_select 0, %s8, %s6
  $region1: #{tpu_custom_call.1} parent=0
    #allocation3 [shape = 'u8[4096]{0}', space=vmem, size = 0x1000, scoped, tag = 'input window, operand 0']
    #allocation4 [shape = 's32[2]{0}', space=sflag, size = 0x8, scoped, tag = 'scoped memory for tpu_custom_call.1']
    #allocation5 [shape = 's32[2]{0}', space=sflag, size = 0x8, scoped, tag = 'scoped memory for tpu_custom_call.1']
    #allocation6 [shape = 'u8[32768]{0}', space=vmem, size = 0x8000, scoped, tag = 'input window, operand 1, single buffered']
    #allocation7 [shape = 's32[1]{0}', space=sflag, size = 0x4, scoped, tag = 'scoped memory for tpu_custom_call.1']
    #allocation8 [shape = 'u8[32768]{0}', space=vmem, size = 0x8000, scoped, tag = 'input window, operand 3, single buffered']
    #allocation9 [shape = 'u8[8192]{0}', space=vmem, size = 0x2000, scoped, tag = 'output window, operand 0']
    %10 = vsyncpa [#allocation4], 0
    %s11 = scalar_lea.sflag [#allocation4], 1
    %12 = vsyncpa %s11, 0
    %13 = vsyncpa [#allocation7], 0
    %14 = vsyncpa [#allocation5], 0
    %s15 = scalar_lea.sflag [#allocation5], 1
    %16 = vsyncpa %s15, 0
    loop: start=0, step=1, limit=4
    $region2: #{tpu_custom_call.1} parent=1 // loop_pre_header
      _
    $region3: #{tpu_custom_call.1} parent=1 // loop_header
      %s18 = sphi 0, %s22
      %p19 = scmp.ge.s32.totalorder %s18, 4
      %s25 = sphi 0, %s37
      %s26 = sphi 0, %s33
      %s27 = sphi 0, %s25
      %s28 = sphi 0, %s26
      %s29 = sphi 0, %s27
      %s30 = sphi 0, %s28
      %s40 = sphi 0, %s42
      %s43 = sphi 0, %s40
      %s44 = sphi 0, %s43
      %s60 = sphi 0, %s44
      %s66 = sphi 0, %s68
      %s69 = sphi 0, %s66
      %s70 = sphi 0, %s69
      %s86 = sphi 0, %s70
      %s92 = sphi 0, %s94
      %s95 = sphi 0, %s92
      %s96 = sphi 0, %s95
      %s112 = sphi 0, %s96
      %s118 = sphi 0, %s120
      %s121 = sphi 0, %s118
      %s122 = sphi 0, %s121
      %s138 = sphi 0, %s122
      %s142 = sphi 0, %s142
      %s144 = sphi 0, %s142
      %s145 = sphi 0, %s144
      %s159 = sphi 0, %s145
      %s165 = sphi 0, %s167
      %s168 = sphi 0, %s165
      %s169 = sphi 0, %s168
      %s185 = sphi 0, %s169
    $region4: #{tpu_custom_call.1} parent=1 // loop_header_branch
      %21 = sbr.rel (%p19) target = $region8
    $region5: #{tpu_custom_call.1} parent=1 // loop_body
      %s23 = ssub.s32 %s18, 1
      %s24 = ssub.s32 %s18, 2
      %s31 = sadd.s32 1, %s26
      %p32 = scmp.ge.s32.totalorder %s31, 1
      %s33 = scalar_select %p32, 0, %s31
      %s34 = sadd.s32 1, %s25
      %s35 = scalar_select %p32, %s34, %s25
      %p36 = scmp.ge.s32.totalorder %s35, 2
      %s37 = scalar_select %p36, 0, %s35
      %s38 = ssub.s32 %s25, %s37
      %p39 = scmp.eq.s32.totalorder %s38, 0
      %s41 = sadd.s32 %s40, 1
      %s42 = scalar_select %p39, %s40, %s41
      %p45 = pneg %p39
      %p46 = scmp.eq.s32.totalorder %s18, 1
      %p47 = por %p45, %p46
      %p48 = scmp.ne.s32.totalorder %s40, %s43
      %p49 = scmp.eq.s32.totalorder %s18, 0
      %p50 = por %p48, %p49
      %p51 = scmp.ne.s32.totalorder %s40, %s43
      %p52 = scmp.eq.s32.totalorder %s23, 1
      %p53 = por %p51, %p52
      %p54 = scmp.ne.s32.totalorder %s43, %s44
      %p55 = scmp.eq.s32.totalorder %s23, 0
      %p56 = por %p54, %p55
      %p57 = scmp.ne.s32.totalorder %s43, %s44
      %p58 = scmp.eq.s32.totalorder %s24, 1
      %p59 = por %p57, %p58
      %p61 = scmp.ne.s32.totalorder %s44, %s60
      %p62 = scmp.eq.s32.totalorder %s24, 0
      %p63 = por %p61, %p62
      %s64 = ssub.s32 %s26, %s33
      %p65 = scmp.eq.s32.totalorder %s64, 0
      %s67 = sadd.s32 %s66, 1
      %s68 = scalar_select %p65, %s66, %s67
      %p71 = pneg %p65
      %p72 = scmp.eq.s32.totalorder %s18, 1
      %p73 = por %p71, %p72
      %p74 = scmp.ne.s32.totalorder %s66, %s69
      %p75 = scmp.eq.s32.totalorder %s18, 0
      %p76 = por %p74, %p75
      %p77 = scmp.ne.s32.totalorder %s66, %s69
      %p78 = scmp.eq.s32.totalorder %s23, 1
      %p79 = por %p77, %p78
      %p80 = scmp.ne.s32.totalorder %s69, %s70
      %p81 = scmp.eq.s32.totalorder %s23, 0
      %p82 = por %p80, %p81
      %p83 = scmp.ne.s32.totalorder %s69, %s70
      %p84 = scmp.eq.s32.totalorder %s24, 1
      %p85 = por %p83, %p84
      %p87 = scmp.ne.s32.totalorder %s70, %s86
      %p88 = scmp.eq.s32.totalorder %s24, 0
      %p89 = por %p87, %p88
      %s90 = ssub.s32 %s26, %s33
      %p91 = scmp.eq.s32.totalorder %s90, 0
      %s93 = sadd.s32 %s92, 1
      %s94 = scalar_select %p91, %s92, %s93
      %p97 = pneg %p91
      %p98 = scmp.eq.s32.totalorder %s18, 1
      %p99 = por %p97, %p98
      %p100 = scmp.ne.s32.totalorder %s92, %s95
      %p101 = scmp.eq.s32.totalorder %s18, 0
      %p102 = por %p100, %p101
      %p103 = scmp.ne.s32.totalorder %s92, %s95
      %p104 = scmp.eq.s32.totalorder %s23, 1
      %p105 = por %p103, %p104
      %p106 = scmp.ne.s32.totalorder %s95, %s96
      %p107 = scmp.eq.s32.totalorder %s23, 0
      %p108 = por %p106, %p107
      %p109 = scmp.ne.s32.totalorder %s95, %s96
      %p110 = scmp.eq.s32.totalorder %s24, 1
      %p111 = por %p109, %p110
      %p113 = scmp.ne.s32.totalorder %s96, %s112
      %p114 = scmp.eq.s32.totalorder %s24, 0
      %p115 = por %p113, %p114
      %s116 = ssub.s32 %s26, %s33
      %p117 = scmp.eq.s32.totalorder %s116, 0
      %s119 = sadd.s32 %s118, 1
      %s120 = scalar_select %p117, %s118, %s119
      %p123 = pneg %p117
      %p124 = scmp.eq.s32.totalorder %s18, 1
      %p125 = por %p123, %p124
      %p126 = scmp.ne.s32.totalorder %s118, %s121
      %p127 = scmp.eq.s32.totalorder %s18, 0
      %p128 = por %p126, %p127
      %p129 = scmp.ne.s32.totalorder %s118, %s121
      %p130 = scmp.eq.s32.totalorder %s23, 1
      %p131 = por %p129, %p130
      %p132 = scmp.ne.s32.totalorder %s121, %s122
      %p133 = scmp.eq.s32.totalorder %s23, 0
      %p134 = por %p132, %p133
      %p135 = scmp.ne.s32.totalorder %s121, %s122
      %p136 = scmp.eq.s32.totalorder %s24, 1
      %p137 = por %p135, %p136
      %p139 = scmp.ne.s32.totalorder %s122, %s138
      %p140 = scmp.eq.s32.totalorder %s24, 0
      %p141 = por %p139, %p140
      %s143 = sadd.s32 %s142, 1
      %p146 = scmp.eq.s32.totalorder %s18, 1
      %p147 = scmp.ne.s32.totalorder %s142, %s144
      %p148 = scmp.eq.s32.totalorder %s18, 0
      %p149 = por %p147, %p148
      %p150 = scmp.ne.s32.totalorder %s142, %s144
      %p151 = scmp.eq.s32.totalorder %s23, 1
      %p152 = por %p150, %p151
      %p153 = scmp.ne.s32.totalorder %s144, %s145
      %p154 = scmp.eq.s32.totalorder %s23, 0
      %p155 = por %p153, %p154
      %p156 = scmp.ne.s32.totalorder %s144, %s145
      %p157 = scmp.eq.s32.totalorder %s24, 1
      %p158 = por %p156, %p157
      %p160 = scmp.ne.s32.totalorder %s145, %s159
      %p161 = scmp.eq.s32.totalorder %s24, 0
      %p162 = por %p160, %p161
      %s163 = ssub.s32 %s25, %s37
      %p164 = scmp.eq.s32.totalorder %s163, 0
      %s166 = sadd.s32 %s165, 1
      %s167 = scalar_select %p164, %s165, %s166
      %p170 = pneg %p164
      %p171 = scmp.eq.s32.totalorder %s18, 1
      %p172 = por %p170, %p171
      %p173 = scmp.ne.s32.totalorder %s165, %s168
      %p174 = scmp.eq.s32.totalorder %s18, 0
      %p175 = por %p173, %p174
      %p176 = scmp.ne.s32.totalorder %s165, %s168
      %p177 = scmp.eq.s32.totalorder %s23, 1
      %p178 = por %p176, %p177
      %p179 = scmp.ne.s32.totalorder %s168, %s169
      %p180 = scmp.eq.s32.totalorder %s23, 0
      %p181 = por %p179, %p180
      %p182 = scmp.ne.s32.totalorder %s168, %s169
      %p183 = scmp.eq.s32.totalorder %s24, 1
      %p184 = por %p182, %p183
      %p186 = scmp.ne.s32.totalorder %s169, %s185
      %p187 = scmp.eq.s32.totalorder %s24, 0
      %p188 = por %p186, %p187
      %p189 = scmp.le.s32.totalorder 1, %s18
      %p190 = scmp.lt.s32.totalorder %s18, 3
      %p191 = pnand %p189, %p190
      %p192 = pneg %p191
      // Predicated region
      $region9: #{tpu_custom_call.1} parent=5 // pred_check
        _
      $region10: #{tpu_custom_call.1} parent=5 // pred_check_branch
        %194 = sbr.rel (%p191) target = $region12
      $region11: #{tpu_custom_call.1} parent=5 // pred_region
        %s195 = ssub.s32 %s18, 1
        // Predicated region
        $region13: #{tpu_custom_call.1} parent=11 // pred_check
          %p196 = pneg %p82
        $region14: #{tpu_custom_call.1} parent=11 // pred_check_branch
          %198 = sbr.rel (%p196) target = $region16
        $region15: #{tpu_custom_call.1} parent=11 // pred_region
          %s200 = ssub.s32 1024, 1024
          %201 = vsyncadd [#allocation7], %s200
          %s202 = smul.addr %s28, 64
          %s203 = scalar_lea.hbm %s1, %s202
          %s204 = sshll.u32 [#allocation6], 4
          %s205 = int_to_ptr.vmem [resolvable:$true] %s204
          %210 = dma.hbm_to_vmem [thread:$0]  %s203, 1024, %s205, [#allocation7], 64, 64, 4
        $region16: #{tpu_custom_call.1} parent=11 // pred_fallthru
          _
        // Predicated region
        $region17: #{tpu_custom_call.1} parent=11 // pred_check
          %p211 = pneg %p108
        $region18: #{tpu_custom_call.1} parent=11 // pred_check_branch
          %213 = sbr.rel (%p211) target = $region20
        $region19: #{tpu_custom_call.1} parent=11 // pred_region
          %p214 = scmp.lt.s32.totalorder %s28, 0
          %s215 = scalar_select %p214, %s28, 0
          %s216 = scalar_lea.vmem %s2, %s215
        $region20: #{tpu_custom_call.1} parent=11 // pred_fallthru
          _
        // Predicated region
        $region21: #{tpu_custom_call.1} parent=11 // pred_check
          %p217 = pneg %p134
        $region22: #{tpu_custom_call.1} parent=11 // pred_check_branch
          %219 = sbr.rel (%p217) target = $region24
        $region23: #{tpu_custom_call.1} parent=11 // pred_region
          %s220 = smul.u32 16, %s28
          %s222 = ssub.s32 1024, 1024
          %223 = vsyncadd [#allocation7], %s222
          %s224 = smul.addr %s220, 64
          %s225 = scalar_lea.hbm %s3, %s224
          %s226 = sshll.u32 [#allocation8], 4
          %s227 = int_to_ptr.vmem [resolvable:$true] %s226
          %232 = dma.hbm_to_vmem [thread:$0]  %s225, 1024, %s227, [#allocation7], 64, 64, 4
        $region24: #{tpu_custom_call.1} parent=11 // pred_fallthru
          _
        // Predicated region
        $region25: #{tpu_custom_call.1} parent=11 // pred_check
          %p233 = pneg %p155
        $region26: #{tpu_custom_call.1} parent=11 // pred_check_branch
          %235 = sbr.rel (%p233) target = $region28
        $region27: #{tpu_custom_call.1} parent=11 // pred_region
          _
        $region28: #{tpu_custom_call.1} parent=11 // pred_fallthru
          _
      $region12: #{tpu_custom_call.1} parent=5 // pred_fallthru
        _
      %p236 = scmp.lt.s32.totalorder %s18, 2
      // Predicated region
      $region29: #{tpu_custom_call.1} parent=5 // pred_check
        %p237 = pneg %p236
      $region30: #{tpu_custom_call.1} parent=5 // pred_check_branch
        %239 = sbr.rel (%p237) target = $region32
      $region31: #{tpu_custom_call.1} parent=5 // pred_region
        // Predicated region
        $region33: #{tpu_custom_call.1} parent=31 // pred_check
          %p240 = pneg %p50
        $region34: #{tpu_custom_call.1} parent=31 // pred_check_branch
          %242 = sbr.rel (%p240) target = $region36
        $region35: #{tpu_custom_call.1} parent=31 // pred_region
          %s243 = sand.u32 %s40, 1
          %s244 = scalar_lea.sflag [#allocation4], %s243
          %s245 = sand.u32 %s40, 1
          %s246 = smul.addr %s245, 4
          %s247 = scalar_lea.vmem [#allocation3], %s246
          %s249 = ssub.s32 64, 64
          %250 = vsyncadd %s244, %s249
          %s251 = smul.addr %s25, 64
          %s252 = scalar_lea.hbm %s0, %s251
          %s254 = sshll.u32 %s247, 4
          %s255 = int_to_ptr.vmem [resolvable:$true] %s254
          %257 = dma.hbm_to_vmem [thread:$0]  %s252, 64, %s255, %s244
        $region36: #{tpu_custom_call.1} parent=31 // pred_fallthru
          _
      $region32: #{tpu_custom_call.1} parent=5 // pred_fallthru
        _
      %p258 = scmp.le.s32.totalorder 1, %s18
      %p259 = scmp.lt.s32.totalorder %s18, 3
      %p260 = pnand %p258, %p259
      %p261 = pneg %p260
      // Predicated region
      $region37: #{tpu_custom_call.1} parent=5 // pred_check
        _
      $region38: #{tpu_custom_call.1} parent=5 // pred_check_branch
        %263 = sbr.rel (%p260) target = $region40
      $region39: #{tpu_custom_call.1} parent=5 // pred_region
        %s264 = ssub.s32 %s18, 1
        %s265 = sand.u32 %s43, 1
        %s266 = scalar_lea.sflag [#allocation4], %s265
        %s267 = sand.u32 %s43, 1
        %s268 = smul.addr %s267, 4
        %s269 = scalar_lea.vmem [#allocation3], %s268
        // Predicated region
        $region41: #{tpu_custom_call.1} parent=39 // pred_check
          %p270 = pneg %p56
        $region42: #{tpu_custom_call.1} parent=39 // pred_check_branch
          %272 = sbr.rel (%p270) target = $region44
        $region43: #{tpu_custom_call.1} parent=39 // pred_region
          %273 = dma.done %s266, 64
        $region44: #{tpu_custom_call.1} parent=39 // pred_fallthru
          _
        // Predicated region
        $region45: #{tpu_custom_call.1} parent=39 // pred_check
          %p274 = pneg %p82
        $region46: #{tpu_custom_call.1} parent=39 // pred_check_branch
          %276 = sbr.rel (%p274) target = $region48
        $region47: #{tpu_custom_call.1} parent=39 // pred_region
          %277 = dma.done [#allocation7], 1024
        $region48: #{tpu_custom_call.1} parent=39 // pred_fallthru
          _
        // Predicated region
        $region49: #{tpu_custom_call.1} parent=39 // pred_check
          %p278 = pneg %p134
        $region50: #{tpu_custom_call.1} parent=39 // pred_check_branch
          %280 = sbr.rel (%p278) target = $region52
        $region51: #{tpu_custom_call.1} parent=39 // pred_region
          %281 = dma.done [#allocation7], 1024
        $region52: #{tpu_custom_call.1} parent=39 // pred_fallthru
          _
        %s282 = sand.u32 %s43, 1
        %s283 = scalar_lea.sflag [#allocation4], %s282
        %s284 = sand.u32 %s43, 1
        %s285 = smul.addr %s284, 4
        %s286 = scalar_lea.vmem [#allocation3], %s285
        %p287 = pneg %p56
        %p288 = pneg %p53
        %p289 = pneg %p82
        %p290 = pneg %p79
        %p291 = scmp.lt.s32.totalorder %s28, 0
        %s292 = scalar_select %p291, %s28, 0
        %s293 = scalar_lea.vmem %s2, %s292
        %p294 = pneg %p108
        %p295 = pneg %p105
        %p296 = pneg %p134
        %p297 = pneg %p131
        %p298 = pneg %p155
        %p299 = pneg %p152
        %p300 = pneg %p181
        %p301 = pneg %p178
        %s302 = sand.u32 %s168, 1
        %s303 = scalar_lea.sflag [#allocation5], %s302
        %s304 = sand.u32 %s168, 1
        %s305 = smul.addr %s304, 8
        %s306 = scalar_lea.vmem [#allocation9], %s305
        %p307 = scmp.lt.s32.totalorder %s28, 0
        %s308 = scalar_select %p307, %s28, 0
        %s309 = scalar_lea.vmem %s2, %s308
        %s310 = smul.u32 16, %s28
        %p312 = scmp.eq.s32.totalorder %s28, 0
        // Predicated region
        $region53: #{tpu_custom_call.1} parent=39 // pred_check
          %p313 = pneg %p312
        $region54: #{tpu_custom_call.1} parent=39 // pred_check_branch
          %315 = sbr.rel (%p313) target = $region56
        $region55: #{tpu_custom_call.1} parent=39 // pred_region
          %316 = vst [vmem:[#allocation2] sm:$0xff] 0.0
        $region56: #{tpu_custom_call.1} parent=39 // pred_fallthru
          _
        %v317 = vld [vmem:[%s269] sm:$0xf]
        %v318 = vld [vmem:[#allocation6] sm:$0xf]
        %v319 = vld [vmem:[#allocation6 + $0x4] sm:$0xf]
        %v320 = vld [vmem:[#allocation6 + $0x8] sm:$0xf]
        %v321 = vld [vmem:[#allocation6 + $0xc] sm:$0xf]
        %v322 = vld [vmem:[#allocation6 + $0x10] sm:$0xf]
        %v323 = vld [vmem:[#allocation6 + $0x14] sm:$0xf]
        %v324 = vld [vmem:[#allocation6 + $0x18] sm:$0xf]
        %v325 = vld [vmem:[#allocation6 + $0x1c] sm:$0xf]
        %v326 = vld [vmem:[#allocation6 + $0x20] sm:$0xf]
        %v327 = vld [vmem:[#allocation6 + $0x24] sm:$0xf]
        %v328 = vld [vmem:[#allocation6 + $0x28] sm:$0xf]
        %v329 = vld [vmem:[#allocation6 + $0x2c] sm:$0xf]
        %v330 = vld [vmem:[#allocation6 + $0x30] sm:$0xf]
        %v331 = vld [vmem:[#allocation6 + $0x34] sm:$0xf]
        %v332 = vld [vmem:[#allocation6 + $0x38] sm:$0xf]
        %v333 = vld [vmem:[#allocation6 + $0x3c] sm:$0xf]
        %v334 = vld [vmem:[%s309] sm:$0x1]
        %v336 = vlaneseq
        %v337 = vshrl.u32 %v336, 7
        %v338 = vsub.s32 0, %v337
        %v339 = vrot.slane %v334, %v338
        %v357 = vunpack.c.l.b16 %v318
        %v358 = vunpack.c.l.b16 %v319
        %v359 = vunpack.c.l.b16 %v320
        %v360 = vunpack.c.l.b16 %v321
        %v361 = vunpack.c.l.b16 %v322
        %v362 = vunpack.c.l.b16 %v323
        %v363 = vunpack.c.l.b16 %v324
        %v364 = vunpack.c.l.b16 %v325
        %v365 = vunpack.c.l.b16 %v326
        %v366 = vunpack.c.l.b16 %v327
        %v367 = vunpack.c.l.b16 %v328
        %v368 = vunpack.c.l.b16 %v329
        %v369 = vunpack.c.l.b16 %v330
        %v370 = vunpack.c.l.b16 %v331
        %v371 = vunpack.c.l.b16 %v332
        %v372 = vunpack.c.l.b16 %v333
        %v373 = vpack.c.b16 %v358, %v357
        %v374 = vpack.c.b16 %v360, %v359
        %v375 = vpack.c.b16 %v362, %v361
        %v376 = vpack.c.b16 %v364, %v363
        %v377 = vpack.c.b16 %v366, %v365
        %v378 = vpack.c.b16 %v368, %v367
        %v379 = vpack.c.b16 %v370, %v369
        %v380 = vpack.c.b16 %v372, %v371
        %389 = vmatprep.subr.bf16.mxu0 0
        %390 = vmatpush1.bf16.msra.mxu0 %v380
        %391 = vmatprep.subr.bf16.mxu0 0
        %392 = vmatpush1.bf16.msra.mxu0 %v379
        %393 = vmatprep.subr.bf16.mxu0 0
        %394 = vmatpush1.bf16.msra.mxu0 %v378
        %395 = vmatprep.subr.bf16.mxu0 0
        %396 = vmatpush1.bf16.msra.mxu0 %v377
        %397 = vmatprep.subr.bf16.mxu0 0
        %398 = vmatpush1.bf16.msra.mxu0 %v376
        %399 = vmatprep.subr.bf16.mxu0 0
        %400 = vmatpush1.bf16.msra.mxu0 %v375
        %401 = vmatprep.subr.bf16.mxu0 0
        %402 = vmatpush1.bf16.msra.mxu0 %v374
        %403 = vmatprep.subr.bf16.mxu0 0
        %404 = vmatpush1.bf16.msra.mxu0 %v373
        %405 = vmatprep.subr.bf16.mxu0 0
        %406 = vmatpush2.bf16.msra.mxu0 0
        %407 = vmatprep.subr.bf16.mxu0 0
        %408 = vmatpush2.bf16.msra.mxu0 0
        %409 = vmatprep.subr.bf16.mxu0 0
        %410 = vmatpush2.bf16.msra.mxu0 0
        %411 = vmatprep.subr.bf16.mxu0 0
        %412 = vmatpush2.bf16.msra.mxu0 0
        %413 = vmatprep.subr.bf16.mxu0 0
        %414 = vmatpush2.bf16.msra.mxu0 0
        %415 = vmatprep.subr.bf16.mxu0 0
        %416 = vmatpush2.bf16.msra.mxu0 0
        %417 = vmatprep.subr.bf16.mxu0 0
        %418 = vmatpush2.bf16.msra.mxu0 0
        %419 = vmatprep.subr.bf16.mxu0 0
        %420 = vmatpush2.bf16.msra.mxu0 0
        %421 = vmatprep.mubr.bf16.mxu0 0
        %422 = vmatmul.mubr.bf16.gmra.mxu0 %v317
        %v423 = vpop.f32.mrf.mxu0
        %v424 = vadd.f32 %v339, %v423
        %v425 = vpop.f32.mrf.mxu0
        %v426 = vpop.f32.mrf.mxu0
        %v427 = vpop.f32.mrf.mxu0
        %428 = vdwg.mxu0
        %v429 = vmul.f32 %v424, %v424
        %v430 = vmul.f32 %v424, %v429
        %v431 = vmul.f32 %v430, 0.044715
        %v432 = vadd.f32 %v424, %v431
        %v433 = vmul.f32 %v432, 0.7978846
        %v434 = vtanh.pop %v433
        %v435 = vadd.f32 %v434, 1.0
        %v436 = vmul.f32 %v435, 0.5
        %v437 = vmul.f32 %v424, %v436
        %v438 = vld [vmem:[#allocation2] sm:$0xff]
        %v439 = vpack.c.bf16 %v437, %v437
        %v440 = vld [vmem:[#allocation8] sm:$0xf]
        %v441 = vld [vmem:[#allocation8 + $0x4] sm:$0xf]
        %v442 = vld [vmem:[#allocation8 + $0x8] sm:$0xf]
        %v443 = vld [vmem:[#allocation8 + $0xc] sm:$0xf]
        %v444 = vld [vmem:[#allocation8 + $0x10] sm:$0xf]
        %v445 = vld [vmem:[#allocation8 + $0x14] sm:$0xf]
        %v446 = vld [vmem:[#allocation8 + $0x18] sm:$0xf]
        %v447 = vld [vmem:[#allocation8 + $0x1c] sm:$0xf]
        %v448 = vld [vmem:[#allocation8 + $0x20] sm:$0xf]
        %v449 = vld [vmem:[#allocation8 + $0x24] sm:$0xf]
        %v450 = vld [vmem:[#allocation8 + $0x28] sm:$0xf]
        %v451 = vld [vmem:[#allocation8 + $0x2c] sm:$0xf]
        %v452 = vld [vmem:[#allocation8 + $0x30] sm:$0xf]
        %v453 = vld [vmem:[#allocation8 + $0x34] sm:$0xf]
        %v454 = vld [vmem:[#allocation8 + $0x38] sm:$0xf]
        %v455 = vld [vmem:[#allocation8 + $0x3c] sm:$0xf]
        %v472 = vunpack.c.l.b16 %v440
        %v473 = vunpack.c.l.b16 %v441
        %v474 = vunpack.c.l.b16 %v442
        %v475 = vunpack.c.l.b16 %v443
        %v476 = vunpack.c.l.b16 %v444
        %v477 = vunpack.c.l.b16 %v445
        %v478 = vunpack.c.l.b16 %v446
        %v479 = vunpack.c.l.b16 %v447
        %v480 = vunpack.c.l.b16 %v448
        %v481 = vunpack.c.l.b16 %v449
        %v482 = vunpack.c.l.b16 %v450
        %v483 = vunpack.c.l.b16 %v451
        %v484 = vunpack.c.l.b16 %v452
        %v485 = vunpack.c.l.b16 %v453
        %v486 = vunpack.c.l.b16 %v454
        %v487 = vunpack.c.l.b16 %v455
        %v488 = vpack.c.b16 %v473, %v472
        %v489 = vpack.c.b16 %v475, %v474
        %v490 = vpack.c.b16 %v477, %v476
        %v491 = vpack.c.b16 %v479, %v478
        %v492 = vpack.c.b16 %v481, %v480
        %v493 = vpack.c.b16 %v483, %v482
        %v494 = vpack.c.b16 %v485, %v484
        %v495 = vpack.c.b16 %v487, %v486
        %504 = vmatprep.subr.bf16.mxu0 0
        %505 = vmatpush1.bf16.msra.mxu0 %v495
        %506 = vmatprep.subr.bf16.mxu0 0
        %507 = vmatpush1.bf16.msra.mxu0 %v494
        %508 = vmatprep.subr.bf16.mxu0 0
        %509 = vmatpush1.bf16.msra.mxu0 %v493
        %510 = vmatprep.subr.bf16.mxu0 0
        %511 = vmatpush1.bf16.msra.mxu0 %v492
        %512 = vmatprep.subr.bf16.mxu0 0
        %513 = vmatpush1.bf16.msra.mxu0 %v491
        %514 = vmatprep.subr.bf16.mxu0 0
        %515 = vmatpush1.bf16.msra.mxu0 %v490
        %516 = vmatprep.subr.bf16.mxu0 0
        %517 = vmatpush1.bf16.msra.mxu0 %v489
        %518 = vmatprep.subr.bf16.mxu0 0
        %519 = vmatpush1.bf16.msra.mxu0 %v488
        %520 = vmatprep.subr.bf16.mxu0 0
        %521 = vmatpush2.bf16.msra.mxu0 0
        %522 = vmatprep.subr.bf16.mxu0 0
        %523 = vmatpush2.bf16.msra.mxu0 0
        %524 = vmatprep.subr.bf16.mxu0 0
        %525 = vmatpush2.bf16.msra.mxu0 0
        %526 = vmatprep.subr.bf16.mxu0 0
        %527 = vmatpush2.bf16.msra.mxu0 0
        %528 = vmatprep.subr.bf16.mxu0 0
        %529 = vmatpush2.bf16.msra.mxu0 0
        %530 = vmatprep.subr.bf16.mxu0 0
        %531 = vmatpush2.bf16.msra.mxu0 0
        %532 = vmatprep.subr.bf16.mxu0 0
        %533 = vmatpush2.bf16.msra.mxu0 0
        %534 = vmatprep.subr.bf16.mxu0 0
        %535 = vmatpush2.bf16.msra.mxu0 0
        %536 = vmatprep.mubr.bf16.mxu0 0
        %537 = vmatmul.mubr.bf16.gmra.mxu0 %v439
        %v538 = vpop.f32.mrf.mxu0
        %v539 = vadd.f32 0.0, %v538
        %v540 = vpop.f32.mrf.mxu0
        %v541 = vpop.f32.mrf.mxu0
        %v542 = vpop.f32.mrf.mxu0
        %543 = vdwg.mxu0
        %v544 = vadd.f32 %v438, %v539
        %545 = vst [vmem:[#allocation2] sm:$0xff] %v544
        // Predicated region
        $region57: #{tpu_custom_call.1} parent=39 // pred_check
          %p546 = pneg %p312
        $region58: #{tpu_custom_call.1} parent=39 // pred_check_branch
          %548 = sbr.rel (%p546) target = $region60
        $region59: #{tpu_custom_call.1} parent=39 // pred_region
          %v549 = vld [vmem:[#allocation2] sm:$0xff]
          %v550 = vld [vmem:[%s4] sm:$0x1]
          %v552 = vlaneseq
          %v553 = vshrl.u32 %v552, 7
          %v554 = vsub.s32 0, %v553
          %v555 = vrot.slane %v550, %v554
          %v557 = vadd.f32 %v549, %v555
          %558 = vst [vmem:[%s306] sm:$0xff] %v557
        $region60: #{tpu_custom_call.1} parent=39 // pred_fallthru
          _
        %s559 = sand.u32 %s168, 1
        %s560 = scalar_lea.sflag [#allocation5], %s559
        %s561 = sand.u32 %s168, 1
        %s562 = smul.addr %s561, 8
        %s563 = scalar_lea.vmem [#allocation9], %s562
        // Predicated region
        $region61: #{tpu_custom_call.1} parent=39 // pred_check
          %p564 = pneg %p178
        $region62: #{tpu_custom_call.1} parent=39 // pred_check_branch
          %566 = sbr.rel (%p564) target = $region64
        $region63: #{tpu_custom_call.1} parent=39 // pred_region
          %s568 = ssub.s32 128, 128
          %569 = vsyncadd %s560, %s568
          %s570 = smul.addr %s27, 128
          %s571 = scalar_lea.hbm %s5, %s570
          %s573 = sshll.u32 %s563, 4
          %s574 = int_to_ptr.vmem [resolvable:$true] %s573
          %576 = dma.vmem_to_hbm [thread:$0]  %s574, 128, %s571, %s560
        $region64: #{tpu_custom_call.1} parent=39 // pred_fallthru
          _
      $region40: #{tpu_custom_call.1} parent=5 // pred_fallthru
        _
      %p577 = scmp.le.s32.totalorder 2, %s18
      // Predicated region
      $region65: #{tpu_custom_call.1} parent=5 // pred_check
        %p578 = pneg %p577
      $region66: #{tpu_custom_call.1} parent=5 // pred_check_branch
        %580 = sbr.rel (%p578) target = $region68
      $region67: #{tpu_custom_call.1} parent=5 // pred_region
        %s581 = ssub.s32 %s18, 2
        // Predicated region
        $region69: #{tpu_custom_call.1} parent=67 // pred_check
          %p582 = pneg %p184
        $region70: #{tpu_custom_call.1} parent=67 // pred_check_branch
          %584 = sbr.rel (%p582) target = $region72
        $region71: #{tpu_custom_call.1} parent=67 // pred_region
          %s585 = sand.u32 %s169, 1
          %s586 = scalar_lea.sflag [#allocation5], %s585
          %s587 = sand.u32 %s169, 1
          %s588 = smul.addr %s587, 8
          %s589 = scalar_lea.vmem [#allocation9], %s588
          %590 = dma.done %s586, 128
        $region72: #{tpu_custom_call.1} parent=67 // pred_fallthru
          _
      $region68: #{tpu_custom_call.1} parent=5 // pred_fallthru
        _
    $region6: #{tpu_custom_call.1} parent=1 // loop_footer
      %s22 = sadd.s32 1, %s18
    $region7: #{tpu_custom_call.1} parent=1 // loop_footer_branch
      %17 = sbr.rel target = $region3
    $region8: #{tpu_custom_call.1} parent=1 // loop_exit
      _
    %591 = vsyncpa [#allocation4], 1
    %s592 = scalar_lea.sflag [#allocation4], 1
    %593 = vsyncpa %s592, 1
    %594 = vsyncpa [#allocation7], 1
    %595 = vsyncpa [#allocation5], 1
    %s596 = scalar_lea.sflag [#allocation5], 1
    %597 = vsyncpa %s596, 1

</llo_original>
